<compile_context>
chip_gen: v6e
topology: v6e:2x2x1
jax: 0.10.0
libtpu: 0.0.40
codegen_flags: <defaults>
</compile_context>

<pallas_src>
from functools import partial

import jax
import jax.numpy as jnp
from jax.experimental import pallas as pl
from jax.experimental.pallas import tpu as pltpu

_USE_ERF = True        # exact-erf GELU if it lowers in-kernel (probed once)
_BUFFERED1_OK = False  # pipeline_mode=pl.Buffered(1) supported (probed once)
_CFG = None            # per-generation VMEM / tiling config (lazy)


def _probe_erf():
    """One-time tiny probe: exact-erf GELU if it lowers, tanh-approx fallback otherwise."""
    global _USE_ERF

    def k(x_ref, o_ref):
        o_ref[...] = jax.lax.erf(x_ref[...])

    try:
        jax.block_until_ready(
            pl.pallas_call(k, out_shape=jax.ShapeDtypeStruct((8, 128), jnp.float32))(
                jnp.zeros((8, 128), jnp.float32)))
        _USE_ERF = True
    except Exception:
        # TODO(synk): exact erf not lowerable in-kernel on this backend; tanh-approx GELU fallback.
        _USE_ERF = False


def _probe_buffered():
    """One-time probe: can constant-index weight blocks use pipeline_mode=pl.Buffered(1)?"""
    global _BUFFERED1_OK

    def k(x_ref, w_ref, o_ref):
        o_ref[...] = x_ref[...] + w_ref[...]

    try:
        w_spec = pl.BlockSpec((8, 128), lambda i: (0, 0), pipeline_mode=pl.Buffered(1))
        jax.block_until_ready(pl.pallas_call(
            k, grid=(2,),
            in_specs=[pl.BlockSpec((8, 128), lambda i: (i, 0)), w_spec],
            out_specs=pl.BlockSpec((8, 128), lambda i: (i, 0)),
            out_shape=jax.ShapeDtypeStruct((16, 128), jnp.float32),
        )(jnp.zeros((16, 128), jnp.float32), jnp.zeros((8, 128), jnp.float32)))
        _BUFFERED1_OK = True
    except Exception:
        _BUFFERED1_OK = False


def _get_cfg():
    """Per-generation VMEM limit / row budget / patch-embed tile (v5e,v6e: 128 MiB; v7x: 64 MiB)."""
    global _CFG
    if _CFG is None:
        vmem_cap = None
        try:
            vmem_cap = getattr(pltpu.get_tpu_info(), 'vmem_capacity_bytes', None)
        except Exception:
            vmem_cap = None
        if vmem_cap is None:
            vmem_cap = 64 * 1024 * 1024  # conservative default (v7x-sized)
        if vmem_cap >= 100 * 1024 * 1024:          # v5e / v6e (128 MiB VMEM)
            _CFG = dict(vmem_limit=96 * 1024 * 1024, max_rows=1024, tile_m=512)
        else:                                       # v7x (64 MiB VMEM)
            _CFG = dict(vmem_limit=48 * 1024 * 1024, max_rows=512, tile_m=256)
    return _CFG


def _gelu(x):
    if _USE_ERF:  # exact GELU, matches torch.nn.GELU() default
        return 0.5 * x * (1.0 + jax.lax.erf(x * 0.7071067811865476))
    return 0.5 * x * (1.0 + jnp.tanh(0.7978845608028654 * (x + 0.044715 * x * x * x)))


def _round_up(v, m):
    return (v + m - 1) // m * m


def _const_spec(shape):
    """BlockSpec for a block that is resident (constant index_map); single-buffered if supported."""
    zero_map = lambda i, _n=len(shape): (0,) * _n
    if _BUFFERED1_OK:
        return pl.BlockSpec(shape, zero_map, pipeline_mode=pl.Buffered(1))
    return pl.BlockSpec(shape, zero_map)


def _pick_batch_tile(batch, n_pad, max_rows, min_grid=2):
    """Largest divisor of `batch` keeping bt*n_pad <= max_rows AND the grid >= min_grid steps
    (so v7x's 2 TensorCores get shardable work and the pipeline has something to overlap)."""
    divs = [d for d in range(1, batch + 1) if batch % d == 0]
    best = None
    for d in divs:
        if d * n_pad <= max(max_rows, n_pad) and (batch // d) >= min_grid:
            best = d
    if best is None:  # can't reach min_grid (tiny batch): fall back to row constraint only
        for d in divs:
            if d * n_pad <= max(max_rows, n_pad):
                best = d
        if best is None:
            best = 1
    return best


# ----------------------------- Pallas kernels ------------------------------

def _mm_bias_kernel(x_ref, w_ref, b_ref, o_ref):
    # bf16 MXU inputs, f32 accumulation; bias added in f32.
    o_ref[...] = (jnp.dot(x_ref[...].astype(w_ref.dtype), w_ref[...],
                          preferred_element_type=jnp.float32) + b_ref[0])


def pallas_linear(x2d, w_t, b_row, tile_m=None):
    """y = x2d @ w_t + b, tiled & pipelined over M; weights stay resident (constant index_map)."""
    cfg = _get_cfg()
    if tile_m is None:
        tile_m = cfg['tile_m']
    m, k = x2d.shape
    n = w_t.shape[1]
    tm = m if m <= tile_m else tile_m
    return pl.pallas_call(
        _mm_bias_kernel,
        grid=(pl.cdiv(m, tm),),
        in_specs=[pl.BlockSpec((tm, k), lambda i: (i, 0)),
                  _const_spec((k, n)),
                  _const_spec((1, n))],
        out_specs=pl.BlockSpec((tm, n), lambda i: (i, 0)),
        out_shape=jax.ShapeDtypeStruct((m, n), jnp.float32),
        compiler_params=pltpu.CompilerParams(
            dimension_semantics=("parallel",),
            vmem_limit_bytes=cfg['vmem_limit']),
    )(x2d, w_t, b_row)


def _block_kernel(x_ref, ln1w_ref, ln1b_ref, qkvw_ref, qkvb_ref, projw_ref, projb_ref,
                  ln2w_ref, ln2b_ref, fc1w_ref, fc1b_ref, fc2w_ref, fc2b_ref, *rest,
                  bt, n_pad, n_valid, num_heads, eps, apply_final_ln):
    if apply_final_ln:
        fnw_ref, fnb_ref, out_ref, attn_ref, ao_scr = rest
    else:
        out_ref, attn_ref, ao_scr = rest
        fnw_ref = fnb_ref = None

    C = x_ref.shape[-1]
    hd = C // num_heads
    cdt = qkvw_ref.dtype  # bf16 compute dtype for MXU inputs; accumulate in f32

    def ln(v, w, b):
        mu = jnp.mean(v, axis=-1, keepdims=True)
        var = jnp.mean(jnp.square(v - mu), axis=-1, keepdims=True)
        return (v - mu) * jax.lax.rsqrt(var + eps) * w + b

    x = x_ref[...]                                           # (bt * n_pad, C), f32 residual stream

    # ----- Attention: one batch-folded (bt*n_pad, C) x (C, 3C) matmul feeds all heads -----
    xn = ln(x, ln1w_ref[0], ln1b_ref[0])
    qkv = jnp.dot(xn.astype(cdt), qkvw_ref[...],
                  preferred_element_type=jnp.float32) + qkvb_ref[0]
    # softmax scale was folded into the q columns of qkv_w_t / qkv_b at init time

    add_mask = None
    if n_valid < n_pad:  # single hoisted additive mask row for padded key positions
        col = jax.lax.broadcasted_iota(jnp.int32, (1, n_pad), 1)
        add_mask = jnp.where(col < n_valid, 0.0, -1e30).astype(jnp.float32)

    pmax = None
    for h in range(num_heads):  # heads unrolled; each iteration batched over the batch tile
        q = qkv[:, h * hd:(h + 1) * hd].reshape(bt, n_pad, hd).astype(cdt)
        k = qkv[:, C + h * hd:C + (h + 1) * hd].reshape(bt, n_pad, hd).astype(cdt)
        v = qkv[:, 2 * C + h * hd:2 * C + (h + 1) * hd].reshape(bt, n_pad, hd).astype(cdt)
        s = jnp.einsum('bqd,bkd->bqk', q, k, preferred_element_type=jnp.float32)
        if add_mask is not None:
            s = s + add_mask                                   # broadcasts over (b, q) rows
        s = s - jnp.max(s, axis=-1, keepdims=True)
        p = jnp.exp(s)
        p = p * pl.reciprocal(jnp.sum(p, axis=-1, keepdims=True), approx=True)
        pmax = p if pmax is None else jnp.maximum(pmax, p)
        ho = jnp.einsum('bqk,bkd->bqd', p.astype(cdt), v,
                        preferred_element_type=jnp.float32)
        ao_scr[:, h * hd:(h + 1) * hd] = ho.reshape(bt * n_pad, hd)  # slab write, no concat

    attn_ref[...] = pmax.astype(attn_ref.dtype)              # head-max map only, bf16 writeback

    x = x + jnp.dot(ao_scr[...].astype(cdt), projw_ref[...],
                    preferred_element_type=jnp.float32) + projb_ref[0]

    # ----- MLP -----
    xn2 = ln(x, ln2w_ref[0], ln2b_ref[0])
    h1 = jnp.dot(xn2.astype(cdt), fc1w_ref[...],
                 preferred_element_type=jnp.float32) + fc1b_ref[0]
    h1 = _gelu(h1)
    x = x + jnp.dot(h1.astype(cdt), fc2w_ref[...],
                    preferred_element_type=jnp.float32) + fc2b_ref[0]

    if apply_final_ln:                                        # fused model-level norm (last block)
        x = ln(x, fnw_ref[0], fnb_ref[0])
    out_ref[...] = x


def run_block(x2d, bp, num_heads, *, batch, n_pad, n_valid, final_ln=None):
    cfg = _get_cfg()
    bn, C = x2d.shape
    hidden = bp['fc1_w_t'].shape[1]
    bt = _pick_batch_tile(batch, n_pad, cfg['max_rows'])
    grid = (batch // bt,)

    kernel = partial(_block_kernel, bt=bt, n_pad=n_pad, n_valid=n_valid,
                     num_heads=num_heads, eps=1e-6,
                     apply_final_ln=final_ln is not None)

    row_spec = pl.BlockSpec((bt * n_pad, C), lambda i: (i, 0))
    in_specs = [row_spec,
                _const_spec((1, C)), _const_spec((1, C)),            # ln1
                _const_spec((C, 3 * C)), _const_spec((1, 3 * C)),    # qkv
                _const_spec((C, C)), _const_spec((1, C)),            # proj
                _const_spec((1, C)), _const_spec((1, C)),            # ln2
                _const_spec((C, hidden)), _const_spec((1, hidden)),  # fc1
                _const_spec((hidden, C)), _const_spec((1, C))]       # fc2
    args = [x2d, bp['ln1_w'], bp['ln1_b'], bp['qkv_w_t'], bp['qkv_b'],
            bp['proj_w_t'], bp['proj_b'], bp['ln2_w'], bp['ln2_b'],
            bp['fc1_w_t'], bp['fc1_b'], bp['fc2_w_t'], bp['fc2_b']]
    if final_ln is not None:
        in_specs += [_const_spec((1, C)), _const_spec((1, C))]
        args += [final_ln[0], final_ln[1]]

    out, attn = pl.pallas_call(
        kernel,
        grid=grid,
        in_specs=in_specs,
        out_specs=(pl.BlockSpec((bt * n_pad, C), lambda i: (i, 0)),
                   pl.BlockSpec((bt, n_pad, n_pad), lambda i: (i, 0, 0))),
        out_shape=(jax.ShapeDtypeStruct((bn, C), jnp.float32),
                   jax.ShapeDtypeStruct((batch, n_pad, n_pad), jnp.bfloat16)),
        scratch_shapes=[pltpu.VMEM((bt * n_pad, C), jnp.float32)],
        compiler_params=pltpu.CompilerParams(
            dimension_semantics=("parallel",),         # grid >= 2 so v7x shards across its 2 TCs
            vmem_limit_bytes=cfg['vmem_limit']),
    )(*args)
    return out, attn


# ------------------------------ JAX glue ops --------------------------------

def extract_patches_nonoverlap(x, p):
    # x: (B, C, H, W) NCHW -> (B, (H/p)*(W/p), C*p*p), patch inner order (C, ph, pw)
    B, C, H, W = x.shape
    x = x.reshape(B, C, H // p, p, W // p, p)
    x = x.transpose(0, 2, 4, 1, 3, 5)
    return x.reshape(B, (H // p) * (W // p), C * p * p)


def extract_patches_overlap(x, p, s):
    # Vectorized strided im2col (no per-patch Python loop); same (C, ph, pw) inner order
    # and (oh, ow) row-major patch order as F.conv2d(...).flatten(2).transpose(1, 2).
    B, C, H, W = x.shape
    nh = (H - p) // s + 1
    nw = (W - p) // s + 1
    rows = (jnp.arange(nh) * s)[:, None] + jnp.arange(p)[None, :]   # (nh, p)
    cols = (jnp.arange(nw) * s)[:, None] + jnp.arange(p)[None, :]   # (nw, p)
    xr = x[:, :, rows, :]                    # (B, C, nh, p, W)
    xrc = xr[:, :, :, :, cols]               # (B, C, nh, p, nw, p)
    pt = xrc.transpose(0, 2, 4, 1, 3, 5)     # (B, nh, nw, C, p, p)
    return pt.reshape(B, nh * nw, C * p * p)


def rollout_attention(attn_fused, discard_ratio):
    # attn_fused: list of head-max-fused maps (B, N, N) — the kernel already took max over heads.
    B, N, _ = attn_fused[0].shape
    eye = jnp.eye(N, dtype=jnp.float32)
    result = jnp.broadcast_to(eye, (B, N, N))
    for fused in attn_fused:
        flat = fused.reshape(B, N * N)
        remain = int(flat.shape[-1] * (1 - discard_ratio))
        _, idx = jax.lax.top_k(flat, remain)
        keep = jnp.zeros((B, N * N), dtype=bool)
        keep = keep.at[jnp.arange(B)[:, None], idx].set(True)
        keep = keep.at[:, 0].set(True)
        flat = jnp.where(keep, flat, 0.0)
        a = flat.reshape(B, N, N) + eye
        a = a / a.sum(-1, keepdims=True)
        result = jnp.matmul(a, result)
    return result


def bilinear_resize(x, out_h, out_w):
    # PyTorch F.interpolate(mode='bilinear', align_corners=False) semantics.
    B, C, H, W = x.shape

    def src(out_size, in_size):
        scale = in_size / out_size
        o = jnp.arange(out_size, dtype=jnp.float32)
        s = (o + 0.5) * scale - 0.5
        s = jnp.maximum(s, 0.0)
        i0 = jnp.minimum(jnp.floor(s).astype(jnp.int32), in_size - 1)
        i1 = jnp.minimum(i0 + 1, in_size - 1)
        lam = jnp.clip(s - i0.astype(jnp.float32), 0.0, 1.0)
        return i0, i1, lam

    y0, y1, ly = src(out_h, H)
    x0, x1, lx = src(out_w, W)
    r0 = x[:, :, y0, :]
    r1 = x[:, :, y1, :]
    rows = r0 * (1.0 - ly)[None, None, :, None] + r1 * ly[None, None, :, None]
    c0 = rows[:, :, :, x0]
    c1 = rows[:, :, :, x1]
    return c0 * (1.0 - lx) + c1 * lx


def weighted_reservoir_sampling(key, weight, K):
    weight = weight / weight.sum(1, keepdims=True)
    u = jax.random.uniform(key, weight.shape, dtype=weight.dtype)
    r = jnp.power(u, 1.0 / weight)
    _, idx = jax.lax.top_k(r, K)
    return idx


def get_pos_embed_new(pos_embed_new, selected_idx):
    posemb_tok = pos_embed_new[:, :1]                   # (1, 1, D)
    posemb_grid = pos_embed_new[0, 1:]                  # (G, D)
    grid_sel = posemb_grid[selected_idx]                # (B, K, D)
    tok = jnp.broadcast_to(posemb_tok, (selected_idx.shape[0], 1, posemb_tok.shape[-1]))
    return jnp.concatenate([tok, grid_sel], axis=1)


def get_features(tok, pos_embed, params):
    B, n_patch, D = tok.shape
    N = n_patch + 1
    cls = jnp.broadcast_to(params['cls_token'], (B, 1, D))
    x = jnp.concatenate([cls, tok], axis=1) + pos_embed          # (B, N, D)
    n_pad = _round_up(N, 8)
    if n_pad != N:
        x = jnp.pad(x, ((0, 0), (0, n_pad - N), (0, 0)))         # zero pad; keys masked in-kernel
    x2d = x.reshape(B * n_pad, D)

    attns = []
    n_blocks = len(params['blocks'])
    for li, bp in enumerate(params['blocks']):
        fl = (params['norm_w'], params['norm_b']) if li == n_blocks - 1 else None
        x2d, a = run_block(x2d, bp, params['num_heads'],
                           batch=B, n_pad=n_pad, n_valid=N, final_ln=fl)
        attns.append(a[:, :N, :N].astype(jnp.float32))           # drop padding, back to f32
    x = x2d.reshape(B, n_pad, D)[:, :N]                          # final LN already fused
    return x, attns


def vit_forward(x, params, rng, cfg):
    B = x.shape[0]
    p = cfg['patch_size']
    overlap = cfg['overlap']
    D = cfg['embed_dim']
    width = cfg['img_size'] // p
    width_new = (cfg['img_size'] - p) // (p - overlap) + 1
    stride = p - overlap

    # ----- pass 1: non-overlapping PatchEmbed (conv as tiled Pallas matmul, bf16 activations) -----
    patches = extract_patches_nonoverlap(x, p)                         # (B, Np, K)
    n_patch, K = patches.shape[1], patches.shape[2]
    tok = pallas_linear(patches.reshape(B * n_patch, K).astype(jnp.bfloat16),
                        params['conv_w_t'], params['conv_b']).reshape(B, n_patch, D)

    x1, attns = get_features(tok, params['pos_embed'], params)
    # tiny (B, D) x (D, classes) head: left to XLA (pallas_call fixed cost >> work)
    x_cls = jnp.dot(x1[:, 0], params['head_w_t']) + params['head_b'][0]

    # ----- attention rollout & min-max normalization -----
    att_gt = rollout_attention(attns, discard_ratio=0.9)[:, 0, 1:]
    att_min = att_gt.min(1, keepdims=True)
    att_gt = (att_gt - att_min) / (att_gt.max(1, keepdims=True) - att_min)

    # ----- resample overlapping patches guided by attention -----
    att_map = bilinear_resize(att_gt.reshape(B, 1, width, width),
                              width_new, width_new).reshape(B, -1)
    att_map = att_map / att_map.sum(1, keepdims=True)
    sel = weighted_reservoir_sampling(rng, att_map, width * width)
    sel = jnp.sort(sel, axis=1)

    pos_new = get_pos_embed_new(params['pos_embed_new'], sel)

    patches_o = extract_patches_overlap(x, p, stride)                  # (B, Go, K)
    Go = patches_o.shape[1]
    tok_o = pallas_linear(patches_o.reshape(B * Go, K).astype(jnp.bfloat16),
                          params['conv_w_t'], params['conv_b']).reshape(B, Go, D)
    tok_sel = jnp.take_along_axis(tok_o, sel[:, :, None], axis=1)

    x2, _ = get_features(tok_sel, pos_new, params)
    x2_cls = jnp.dot(x2[:, 0], params['head_w_t']) + params['head_b'][0]
    return x_cls, att_gt, x2_cls


# ------------------------------ parameters ----------------------------------

def init_params(key, *, img_size, patch_size, in_chans, embed_dim, depth, num_heads,
                mlp_ratio, num_classes, overlap):
    width = img_size // patch_size
    num_patches = width * width
    width_new = (img_size - patch_size) // (patch_size - overlap) + 1
    hidden = int(embed_dim * mlp_ratio)
    scale = (embed_dim // num_heads) ** -0.5   # folded into q columns of qkv weights
    keys = iter(jax.random.split(key, 8 + 8 * depth))

    def tn(shape):
        return 0.02 * jax.random.truncated_normal(next(keys), -2.0, 2.0, shape, jnp.float32)

    wdt = jnp.bfloat16  # matmul weights in bf16 (f32 accumulation in-kernel)
    params = {
        'num_heads': num_heads,
        # conv weights stored flattened & transposed: (Cin*p*p, D), bias as (1, D)
        'conv_w_t': tn((embed_dim, in_chans, patch_size, patch_size))
                        .reshape(embed_dim, in_chans * patch_size * patch_size).T.astype(wdt),
        'conv_b': tn((1, embed_dim)),
        'cls_token': tn((1, 1, embed_dim)),
        'pos_embed': tn((1, num_patches + 1, embed_dim)),
        'pos_embed_new': tn((1, width_new * width_new + 1, embed_dim)),
        'norm_w': jnp.ones((1, embed_dim), jnp.float32),
        'norm_b': jnp.zeros((1, embed_dim), jnp.float32),
        'head_w_t': tn((num_classes, embed_dim)).T,
        'head_b': jnp.zeros((1, num_classes), jnp.float32),
        'blocks': [],
    }
    for _ in range(depth):
        qkv_w_t = tn((3 * embed_dim, embed_dim)).T                      # (C, 3C)
        qkv_w_t = qkv_w_t.at[:, :embed_dim].multiply(scale)             # fold softmax scale into q
        qkv_b = jnp.zeros((1, 3 * embed_dim), jnp.float32)
        qkv_b = qkv_b.at[:, :embed_dim].multiply(scale)
        params['blocks'].append({
            'ln1_w': jnp.ones((1, embed_dim), jnp.float32),
            'ln1_b': jnp.zeros((1, embed_dim), jnp.float32),
            'qkv_w_t': qkv_w_t.astype(wdt),
            'qkv_b': qkv_b,
            'proj_w_t': tn((embed_dim, embed_dim)).T.astype(wdt),
            'proj_b': jnp.zeros((1, embed_dim), jnp.float32),
            'ln2_w': jnp.ones((1, embed_dim), jnp.float32),
            'ln2_b': jnp.zeros((1, embed_dim), jnp.float32),
            'fc1_w_t': tn((hidden, embed_dim)).T.astype(wdt),
            'fc1_b': jnp.zeros((1, hidden), jnp.float32),
            'fc2_w_t': tn((embed_dim, hidden)).T.astype(wdt),
            'fc2_b': jnp.zeros((1, embed_dim), jnp.float32),
        })
    return params


if __name__ == "__main__":
    _probe_erf()
    _probe_buffered()

    cfg = dict(img_size=16, patch_size=8, in_chans=3, embed_dim=32, depth=2,
               num_heads=4, mlp_ratio=4.0, num_classes=10, overlap=4)

    key = jax.random.PRNGKey(0)
    kp, kx, ks = jax.random.split(key, 3)
    params = init_params(kp, **cfg)
    x = jax.random.normal(kx, (2, cfg['in_chans'], cfg['img_size'], cfg['img_size']),
                          jnp.float32)   # NCHW, same as the PyTorch module input

    x_cls, att_gt, x2_cls = vit_forward(x, params, ks, cfg)
    jax.block_until_ready((x_cls, att_gt, x2_cls))
    assert x_cls.shape == (2, cfg['num_classes'])
    assert att_gt.shape == (2, (cfg['img_size'] // cfg['patch_size']) ** 2)
    assert x2_cls.shape == (2, cfg['num_classes'])
    print("KERNEL_OK")
</pallas_src>

<mosaic_0001>
module attributes {stable_mosaic.version = 11 : i64} {
  func.func @k(%arg0: memref<8x128xf32, #tpu.memory_space<vmem>>, %arg1: memref<8x128xf32, #tpu.memory_space<vmem>>) attributes {dimension_semantics = [], scalar_prefetch = 0 : i64, scratch_operands = 0 : i64, tpu.core_type = #tpu.core_type<tc>} {
    %c0 = arith.constant 0 : index
    %c0_0 = arith.constant 0 : index
    %0 = vector.load %arg0[%c0, %c0_0] : memref<8x128xf32, #tpu.memory_space<vmem>>, vector<8x128xf32>
    %1 = math.erf %0 : vector<8x128xf32>
    %c0_1 = arith.constant 0 : index
    %c0_2 = arith.constant 0 : index
    %2 = vector.load %arg1[%c0_1, %c0_2] : memref<8x128xf32, #tpu.memory_space<vmem>>, vector<8x128xf32>
    tpu.vector_store %arg1[%c0_1, %c0_2], %1 {strides = array<i32>} : memref<8x128xf32, #tpu.memory_space<vmem>>, vector<8x128xf32>,
    return
  }
}

module attributes {stable_mosaic.version = 11 : i64} {
  func.func @k(%arg0: i32, %arg1: memref<8x128xf32, #tpu.memory_space<vmem>>, %arg2: memref<8x128xf32, #tpu.memory_space<vmem>>, %arg3: memref<8x128xf32, #tpu.memory_space<vmem>>) attributes {dimension_semantics = [#tpu.dimension_semantics<arbitrary>], iteration_bounds = array<i64: 2>, scalar_prefetch = 0 : i64, scratch_operands = 0 : i64, tpu.core_type = #tpu.core_type<tc>, window_params = [{transform_indices = @transform_0, window_bounds = array<i64: 8, 128>}, {pipeline_mode = #tpu.pipeline_mode<synchronous>, transform_indices = @transform_1, window_bounds = array<i64: 8, 128>}, {transform_indices = @transform_2, window_bounds = array<i64: 8, 128>}]} {
    %c0 = arith.constant 0 : index
    %c0_0 = arith.constant 0 : index
    %0 = vector.load %arg1[%c0, %c0_0] : memref<8x128xf32, #tpu.memory_space<vmem>>, vector<8x128xf32>
    %c0_1 = arith.constant 0 : index
    %c0_2 = arith.constant 0 : index
    %1 = vector.load %arg2[%c0_1, %c0_2] : memref<8x128xf32, #tpu.memory_space<vmem>>, vector<8x128xf32>
    %2 = arith.addf %0, %1 : vector<8x128xf32>
    %c0_3 = arith.constant 0 : index
    %c0_4 = arith.constant 0 : index
    %3 = vector.load %arg3[%c0_3, %c0_4] : memref<8x128xf32, #tpu.memory_space<vmem>>, vector<8x128xf32>
    tpu.vector_store %arg3[%c0_3, %c0_4], %2 {strides = array<i32>} : memref<8x128xf32, #tpu.memory_space<vmem>>, vector<8x128xf32>,
    return
  }
  func.func @transform_0(%arg0: i32) -> (i32, i32) {
    %c0_i32 = arith.constant 0 : i32
    %c0_i32_0 = arith.constant 0 : i32
    return %arg0, %c0_i32 : i32, i32
  }
  func.func @transform_1(%arg0: i32) -> (i32, i32) {
    %c0_i32 = arith.constant 0 : i32
    %c0_i32_0 = arith.constant 0 : i32
    %c0_i32_1 = arith.constant 0 : i32
    return %c0_i32, %c0_i32_0 : i32, i32
  }
  func.func @transform_2(%arg0: i32) -> (i32, i32) {
    %c0_i32 = arith.constant 0 : i32
    %c0_i32_0 = arith.constant 0 : i32
    return %arg0, %c0_i32 : i32, i32
  }
}

module attributes {stable_mosaic.version = 11 : i64} {
  func.func @_mm_bias_kernel(%arg0: i32, %arg1: memref<8x192xbf16, #tpu.memory_space<vmem>>, %arg2: memref<192x32xbf16, #tpu.memory_space<vmem>>, %arg3: memref<1x32xf32, #tpu.memory_space<vmem>>, %arg4: memref<8x32xf32, #tpu.memory_space<vmem>>) attributes {dimension_semantics = [#tpu.dimension_semantics<parallel>], iteration_bounds = array<i64: 1>, scalar_prefetch = 0 : i64, scratch_operands = 0 : i64, tpu.core_type = #tpu.core_type<tc>, window_params = [{transform_indices = @transform_0, window_bounds = array<i64: 8, 192>}, {pipeline_mode = #tpu.pipeline_mode<synchronous>, transform_indices = @transform_1, window_bounds = array<i64: 192, 32>}, {pipeline_mode = #tpu.pipeline_mode<synchronous>, transform_indices = @transform_2, window_bounds = array<i64: 1, 32>}, {transform_indices = @transform_3, window_bounds = array<i64: 8, 32>}]} {
    %c0 = arith.constant 0 : index
    %c0_0 = arith.constant 0 : index
    %0 = vector.load %arg1[%c0, %c0_0] : memref<8x192xbf16, #tpu.memory_space<vmem>>, vector<8x192xbf16>
    %c0_1 = arith.constant 0 : index
    %c0_2 = arith.constant 0 : index
    %1 = vector.load %arg2[%c0_1, %c0_2] : memref<192x32xbf16, #tpu.memory_space<vmem>>, vector<192x32xbf16>
    %cst = arith.constant dense<0.000000e+00> : vector<8x32xf32>
    %2 = tpu.matmul %0, %1, %cst {dimension_numbers = #tpu.dot_dimension_numbers<[1], [0], [0], [1], [0, 0, 1, 1], [], []>} : vector<8x192xbf16>, vector<192x32xbf16>, vector<8x32xf32> -> vector<8x32xf32>
    %c0_3 = arith.constant 0 : index
    %c0_4 = arith.constant 0 : index
    %3 = vector.load %arg3[%c0_3, %c0_4] : memref<1x32xf32, #tpu.memory_space<vmem>>, vector<1x32xf32>
    %4 = vector.shape_cast %3 : vector<1x32xf32> to vector<32xf32>
    %5 = vector.shape_cast %4 : vector<32xf32> to vector<1x32xf32>
    %6 = vector.broadcast %5 : vector<1x32xf32> to vector<8x32xf32>
    %7 = arith.addf %2, %6 : vector<8x32xf32>
    %c0_5 = arith.constant 0 : index
    %c0_6 = arith.constant 0 : index
    %8 = vector.load %arg4[%c0_5, %c0_6] : memref<8x32xf32, #tpu.memory_space<vmem>>, vector<8x32xf32>
    tpu.vector_store %arg4[%c0_5, %c0_6], %7 {strides = array<i32>} : memref<8x32xf32, #tpu.memory_space<vmem>>, vector<8x32xf32>,
    return
  }
  func.func @transform_0(%arg0: i32) -> (i32, i32) {
    %c0_i32 = arith.constant 0 : i32
    %c0_i32_0 = arith.constant 0 : i32
    return %arg0, %c0_i32 : i32, i32
  }
  func.func @transform_1(%arg0: i32) -> (i32, i32) {
    %c0_i32 = arith.constant 0 : i32
    %c0_i32_0 = arith.constant 0 : i32
    %c0_i32_1 = arith.constant 0 : i32
    return %c0_i32, %c0_i32_0 : i32, i32
  }
  func.func @transform_2(%arg0: i32) -> (i32, i32) {
    %c0_i32 = arith.constant 0 : i32
    %c0_i32_0 = arith.constant 0 : i32
    %c0_i32_1 = arith.constant 0 : i32
    return %c0_i32, %c0_i32_0 : i32, i32
  }
  func.func @transform_3(%arg0: i32) -> (i32, i32) {
    %c0_i32 = arith.constant 0 : i32
    %c0_i32_0 = arith.constant 0 : i32
    return %arg0, %c0_i32 : i32, i32
  }
}

</mosaic_0001>

<llo_original>
// kernel: tpu_custom_call.1
$region0: #{tpu_custom_call.1}
  #allocation0 [shape = 'u32[]', space=smem, size = 0x4, offset = 0x4, fixed_abs, tag = 'smem constant byte address 0x4 - core index']
  #allocation1 [shape = 'u32[144,128]{1,0:T(1,128)}', space=vmem, size = 0x12000, scoped, tag = 'internal scratch']
  %s0 = inlined_call_operand.hbm [shape: f32[8,128], index: 0, kind: input, shape index: {}]
  %s1 = inlined_call_operand.hbm [shape: f32[8,128], index: 1, kind: output, shape index: {}]
  %s2 = sld [smem:[#allocation0]]
  $region18: #{tpu_custom_call.1} parent=0
    _
  %s4 = ssub.s32 1, %s2
  %s5 = scalar_select 0, %s4, %s2
  $region1: #{tpu_custom_call.1} parent=0
    #allocation2 [shape = 'u8[4096]{0}', space=vmem, size = 0x1000, scoped, tag = 'input window, operand 0, single buffered']
    #allocation3 [shape = 's32[1]{0}', space=sflag, size = 0x4, scoped, tag = 'scoped memory for tpu_custom_call.1']
    #allocation4 [shape = 's32[1]{0}', space=sflag, size = 0x4, scoped, tag = 'scoped memory for tpu_custom_call.1']
    #allocation5 [shape = 'u8[4096]{0}', space=vmem, size = 0x1000, scoped, tag = 'output window, operand 0, single buffered']
    %6 = vsyncpa [#allocation3], 0
    %7 = vsyncpa [#allocation4], 0
    // Predicated region
    $region2: #{tpu_custom_call.1} parent=1 // pred_check
      _
    $region3: #{tpu_custom_call.1} parent=1 // pred_check_branch
      %9 = sbr.rel (0) target = $region5
    $region4: #{tpu_custom_call.1} parent=1 // pred_region
      %s11 = ssub.s32 128, 128
      %12 = vsyncadd [#allocation3], %s11
      %s14 = sshll.u32 [#allocation2], 4
      %s15 = int_to_ptr.vmem [resolvable:$true] %s14
      %17 = dma.hbm_to_vmem [thread:$0]  %s0, 128, %s15, [#allocation3]
    $region5: #{tpu_custom_call.1} parent=1 // pred_fallthru
      _
    // Predicated region
    $region6: #{tpu_custom_call.1} parent=1 // pred_check
      _
    $region7: #{tpu_custom_call.1} parent=1 // pred_check_branch
      %19 = sbr.rel (0) target = $region9
    $region8: #{tpu_custom_call.1} parent=1 // pred_region
      %20 = dma.done [#allocation3], 128
    $region9: #{tpu_custom_call.1} parent=1 // pred_fallthru
      _
    %v21 = vld [vmem:[#allocation2] sm:$0xff]
    %v22 = verf.f32.pop %v21
    %23 = vst [vmem:[#allocation5] sm:$0xff] %v22
    // Predicated region
    $region10: #{tpu_custom_call.1} parent=1 // pred_check
      _
    $region11: #{tpu_custom_call.1} parent=1 // pred_check_branch
      %25 = sbr.rel (0) target = $region13
    $region12: #{tpu_custom_call.1} parent=1 // pred_region
      %s27 = ssub.s32 128, 128
      %28 = vsyncadd [#allocation4], %s27
      %s30 = sshll.u32 [#allocation5], 4
      %s31 = int_to_ptr.vmem [resolvable:$true] %s30
      %33 = dma.vmem_to_hbm [thread:$0]  %s31, 128, %s1, [#allocation4]
    $region13: #{tpu_custom_call.1} parent=1 // pred_fallthru
      _
    // Predicated region
    $region14: #{tpu_custom_call.1} parent=1 // pred_check
      _
    $region15: #{tpu_custom_call.1} parent=1 // pred_check_branch
      %35 = sbr.rel (0) target = $region17
    $region16: #{tpu_custom_call.1} parent=1 // pred_region
      %36 = dma.done [#allocation4], 128
    $region17: #{tpu_custom_call.1} parent=1 // pred_fallthru
      _
    %37 = vsyncpa [#allocation3], 1
    %38 = vsyncpa [#allocation4], 1

// kernel: tpu_custom_call.1
$region0: #{tpu_custom_call.1}
  #allocation0 [shape = 'u32[]', space=smem, size = 0x4, offset = 0x4, fixed_abs, tag = 'smem constant byte address 0x4 - core index']
  #allocation1 [shape = 'u32[144,128]{1,0:T(1,128)}', space=vmem, size = 0x12000, scoped, tag = 'internal scratch']
  %s0 = inlined_call_operand.hbm [shape: f32[16,128], index: 0, kind: input, shape index: {}]
  %s1 = inlined_call_operand.hbm [shape: f32[8,128], index: 1, kind: input, shape index: {}]
  %s2 = inlined_call_operand.hbm [shape: f32[16,128], index: 2, kind: output, shape index: {}]
  %s3 = sld [smem:[#allocation0]]
  $region49: #{tpu_custom_call.1} parent=0
    _
  %s5 = ssub.s32 1, %s3
  %s6 = scalar_select 0, %s5, %s3
  $region1: #{tpu_custom_call.1} parent=0
    #allocation2 [shape = 'u8[8192]{0}', space=vmem, size = 0x2000, scoped, tag = 'input window, operand 0']
    #allocation3 [shape = 's32[2]{0}', space=sflag, size = 0x8, scoped, tag = 'scoped memory for tpu_custom_call.1']
    #allocation4 [shape = 's32[2]{0}', space=sflag, size = 0x8, scoped, tag = 'scoped memory for tpu_custom_call.1']
    #allocation5 [shape = 'u8[4096]{0}', space=vmem, size = 0x1000, scoped, tag = 'input window, operand 1, single buffered']
    #allocation6 [shape = 's32[1]{0}', space=sflag, size = 0x4, scoped, tag = 'scoped memory for tpu_custom_call.1']
    #allocation7 [shape = 'u8[8192]{0}', space=vmem, size = 0x2000, scoped, tag = 'output window, operand 0']
    %7 = vsyncpa [#allocation3], 0
    %s8 = scalar_lea.sflag [#allocation3], 1
    %9 = vsyncpa %s8, 0
    %10 = vsyncpa [#allocation6], 0
    %11 = vsyncpa [#allocation4], 0
    %s12 = scalar_lea.sflag [#allocation4], 1
    %13 = vsyncpa %s12, 0
    loop: start=0, step=1, limit=4
    $region2: #{tpu_custom_call.1} parent=1 // loop_pre_header
      _
    $region3: #{tpu_custom_call.1} parent=1 // loop_header
      %s15 = sphi 0, %s19
      %p16 = scmp.ge.s32.totalorder %s15, 4
      %s25 = sphi 0, %s27
      %s28 = sphi 0, %s25
      %s29 = sphi 0, %s28
      %s45 = sphi 0, %s29
      %s49 = sphi 0, %s49
      %s51 = sphi 0, %s49
      %s52 = sphi 0, %s51
      %s66 = sphi 0, %s52
      %s72 = sphi 0, %s74
      %s75 = sphi 0, %s72
      %s76 = sphi 0, %s75
      %s92 = sphi 0, %s76
    $region4: #{tpu_custom_call.1} parent=1 // loop_header_branch
      %18 = sbr.rel (%p16) target = $region8
    $region5: #{tpu_custom_call.1} parent=1 // loop_body
      %s20 = ssub.s32 %s15, 1
      %s21 = ssub.s32 %s15, 2
      %s22 = sadd.s32 %s15, 1
      %s23 = ssub.s32 %s15, %s22
      %p24 = scmp.eq.s32.totalorder %s23, 0
      %s26 = sadd.s32 %s25, 1
      %s27 = scalar_select %p24, %s25, %s26
      %p30 = pneg %p24
      %p31 = scmp.eq.s32.totalorder %s15, 1
      %p32 = por %p30, %p31
      %p33 = scmp.ne.s32.totalorder %s25, %s28
      %p34 = scmp.eq.s32.totalorder %s15, 0
      %p35 = por %p33, %p34
      %p36 = scmp.ne.s32.totalorder %s25, %s28
      %p37 = scmp.eq.s32.totalorder %s20, 1
      %p38 = por %p36, %p37
      %p39 = scmp.ne.s32.totalorder %s28, %s29
      %p40 = scmp.eq.s32.totalorder %s20, 0
      %p41 = por %p39, %p40
      %p42 = scmp.ne.s32.totalorder %s28, %s29
      %p43 = scmp.eq.s32.totalorder %s21, 1
      %p44 = por %p42, %p43
      %p46 = scmp.ne.s32.totalorder %s29, %s45
      %p47 = scmp.eq.s32.totalorder %s21, 0
      %p48 = por %p46, %p47
      %s50 = sadd.s32 %s49, 1
      %p53 = scmp.eq.s32.totalorder %s15, 1
      %p54 = scmp.ne.s32.totalorder %s49, %s51
      %p55 = scmp.eq.s32.totalorder %s15, 0
      %p56 = por %p54, %p55
      %p57 = scmp.ne.s32.totalorder %s49, %s51
      %p58 = scmp.eq.s32.totalorder %s20, 1
      %p59 = por %p57, %p58
      %p60 = scmp.ne.s32.totalorder %s51, %s52
      %p61 = scmp.eq.s32.totalorder %s20, 0
      %p62 = por %p60, %p61
      %p63 = scmp.ne.s32.totalorder %s51, %s52
      %p64 = scmp.eq.s32.totalorder %s21, 1
      %p65 = por %p63, %p64
      %p67 = scmp.ne.s32.totalorder %s52, %s66
      %p68 = scmp.eq.s32.totalorder %s21, 0
      %p69 = por %p67, %p68
      %s70 = ssub.s32 %s15, %s22
      %p71 = scmp.eq.s32.totalorder %s70, 0
      %s73 = sadd.s32 %s72, 1
      %s74 = scalar_select %p71, %s72, %s73
      %p77 = pneg %p71
      %p78 = scmp.eq.s32.totalorder %s15, 1
      %p79 = por %p77, %p78
      %p80 = scmp.ne.s32.totalorder %s72, %s75
      %p81 = scmp.eq.s32.totalorder %s15, 0
      %p82 = por %p80, %p81
      %p83 = scmp.ne.s32.totalorder %s72, %s75
      %p84 = scmp.eq.s32.totalorder %s20, 1
      %p85 = por %p83, %p84
      %p86 = scmp.ne.s32.totalorder %s75, %s76
      %p87 = scmp.eq.s32.totalorder %s20, 0
      %p88 = por %p86, %p87
      %p89 = scmp.ne.s32.totalorder %s75, %s76
      %p90 = scmp.eq.s32.totalorder %s21, 1
      %p91 = por %p89, %p90
      %p93 = scmp.ne.s32.totalorder %s76, %s92
      %p94 = scmp.eq.s32.totalorder %s21, 0
      %p95 = por %p93, %p94
      %p96 = scmp.le.s32.totalorder 1, %s15
      %p97 = scmp.lt.s32.totalorder %s15, 3
      %p98 = pnand %p96, %p97
      %p99 = pneg %p98
      // Predicated region
      $region9: #{tpu_custom_call.1} parent=5 // pred_check
        _
      $region10: #{tpu_custom_call.1} parent=5 // pred_check_branch
        %101 = sbr.rel (%p98) target = $region12
      $region11: #{tpu_custom_call.1} parent=5 // pred_region
        %s102 = ssub.s32 %s15, 1
        // Predicated region
        $region13: #{tpu_custom_call.1} parent=11 // pred_check
          %p103 = pneg %p62
        $region14: #{tpu_custom_call.1} parent=11 // pred_check_branch
          %105 = sbr.rel (%p103) target = $region16
        $region15: #{tpu_custom_call.1} parent=11 // pred_region
          %s107 = ssub.s32 128, 128
          %108 = vsyncadd [#allocation6], %s107
          %s110 = sshll.u32 [#allocation5], 4
          %s111 = int_to_ptr.vmem [resolvable:$true] %s110
          %113 = dma.hbm_to_vmem [thread:$0]  %s1, 128, %s111, [#allocation6]
        $region16: #{tpu_custom_call.1} parent=11 // pred_fallthru
          _
      $region12: #{tpu_custom_call.1} parent=5 // pred_fallthru
        _
      %p114 = scmp.lt.s32.totalorder %s15, 2
      // Predicated region
      $region17: #{tpu_custom_call.1} parent=5 // pred_check
        %p115 = pneg %p114
      $region18: #{tpu_custom_call.1} parent=5 // pred_check_branch
        %117 = sbr.rel (%p115) target = $region20
      $region19: #{tpu_custom_call.1} parent=5 // pred_region
        // Predicated region
        $region21: #{tpu_custom_call.1} parent=19 // pred_check
          %p118 = pneg %p35
        $region22: #{tpu_custom_call.1} parent=19 // pred_check_branch
          %120 = sbr.rel (%p118) target = $region24
        $region23: #{tpu_custom_call.1} parent=19 // pred_region
          %s121 = sand.u32 %s25, 1
          %s122 = scalar_lea.sflag [#allocation3], %s121
          %s123 = sand.u32 %s25, 1
          %s124 = smul.addr %s123, 8
          %s125 = scalar_lea.vmem [#allocation2], %s124
          %s127 = ssub.s32 128, 128
          %128 = vsyncadd %s122, %s127
          %s129 = smul.addr %s15, 128
          %s130 = scalar_lea.hbm %s0, %s129
          %s132 = sshll.u32 %s125, 4
          %s133 = int_to_ptr.vmem [resolvable:$true] %s132
          %135 = dma.hbm_to_vmem [thread:$0]  %s130, 128, %s133, %s122
        $region24: #{tpu_custom_call.1} parent=19 // pred_fallthru
          _
      $region20: #{tpu_custom_call.1} parent=5 // pred_fallthru
        _
      %p136 = scmp.le.s32.totalorder 1, %s15
      %p137 = scmp.lt.s32.totalorder %s15, 3
      %p138 = pnand %p136, %p137
      %p139 = pneg %p138
      // Predicated region
      $region25: #{tpu_custom_call.1} parent=5 // pred_check
        _
      $region26: #{tpu_custom_call.1} parent=5 // pred_check_branch
        %141 = sbr.rel (%p138) target = $region28
      $region27: #{tpu_custom_call.1} parent=5 // pred_region
        %s142 = ssub.s32 %s15, 1
        %s143 = sand.u32 %s28, 1
        %s144 = scalar_lea.sflag [#allocation3], %s143
        %s145 = sand.u32 %s28, 1
        %s146 = smul.addr %s145, 8
        %s147 = scalar_lea.vmem [#allocation2], %s146
        // Predicated region
        $region29: #{tpu_custom_call.1} parent=27 // pred_check
          %p148 = pneg %p41
        $region30: #{tpu_custom_call.1} parent=27 // pred_check_branch
          %150 = sbr.rel (%p148) target = $region32
        $region31: #{tpu_custom_call.1} parent=27 // pred_region
          %151 = dma.done %s144, 128
        $region32: #{tpu_custom_call.1} parent=27 // pred_fallthru
          _
        // Predicated region
        $region33: #{tpu_custom_call.1} parent=27 // pred_check
          %p152 = pneg %p62
        $region34: #{tpu_custom_call.1} parent=27 // pred_check_branch
          %154 = sbr.rel (%p152) target = $region36
        $region35: #{tpu_custom_call.1} parent=27 // pred_region
          %155 = dma.done [#allocation6], 128
        $region36: #{tpu_custom_call.1} parent=27 // pred_fallthru
          _
        %s156 = sand.u32 %s28, 1
        %s157 = scalar_lea.sflag [#allocation3], %s156
        %s158 = sand.u32 %s28, 1
        %s159 = smul.addr %s158, 8
        %s160 = scalar_lea.vmem [#allocation2], %s159
        %p161 = pneg %p41
        %p162 = pneg %p38
        %p163 = pneg %p62
        %p164 = pneg %p59
        %p165 = pneg %p88
        %p166 = pneg %p85
        %s167 = sand.u32 %s75, 1
        %s168 = scalar_lea.sflag [#allocation4], %s167
        %s169 = sand.u32 %s75, 1
        %s170 = smul.addr %s169, 8
        %s171 = scalar_lea.vmem [#allocation7], %s170
        %v172 = vld [vmem:[%s147] sm:$0xff]
        %v173 = vld [vmem:[#allocation5] sm:$0xff]
        %v174 = vadd.f32 %v172, %v173
        %175 = vst [vmem:[%s171] sm:$0xff] %v174
        %s176 = sand.u32 %s75, 1
        %s177 = scalar_lea.sflag [#allocation4], %s176
        %s178 = sand.u32 %s75, 1
        %s179 = smul.addr %s178, 8
        %s180 = scalar_lea.vmem [#allocation7], %s179
        // Predicated region
        $region37: #{tpu_custom_call.1} parent=27 // pred_check
          %p181 = pneg %p85
        $region38: #{tpu_custom_call.1} parent=27 // pred_check_branch
          %183 = sbr.rel (%p181) target = $region40
        $region39: #{tpu_custom_call.1} parent=27 // pred_region
          %s185 = ssub.s32 128, 128
          %186 = vsyncadd %s177, %s185
          %s187 = smul.addr %s20, 128
          %s188 = scalar_lea.hbm %s2, %s187
          %s190 = sshll.u32 %s180, 4
          %s191 = int_to_ptr.vmem [resolvable:$true] %s190
          %193 = dma.vmem_to_hbm [thread:$0]  %s191, 128, %s188, %s177
        $region40: #{tpu_custom_call.1} parent=27 // pred_fallthru
          _
      $region28: #{tpu_custom_call.1} parent=5 // pred_fallthru
        _
      %p194 = scmp.le.s32.totalorder 2, %s15
      // Predicated region
      $region41: #{tpu_custom_call.1} parent=5 // pred_check
        %p195 = pneg %p194
      $region42: #{tpu_custom_call.1} parent=5 // pred_check_branch
        %197 = sbr.rel (%p195) target = $region44
      $region43: #{tpu_custom_call.1} parent=5 // pred_region
        %s198 = ssub.s32 %s15, 2
        // Predicated region
        $region45: #{tpu_custom_call.1} parent=43 // pred_check
          %p199 = pneg %p91
        $region46: #{tpu_custom_call.1} parent=43 // pred_check_branch
          %201 = sbr.rel (%p199) target = $region48
        $region47: #{tpu_custom_call.1} parent=43 // pred_region
          %s202 = sand.u32 %s76, 1
          %s203 = scalar_lea.sflag [#allocation4], %s202
          %s204 = sand.u32 %s76, 1
          %s205 = smul.addr %s204, 8
          %s206 = scalar_lea.vmem [#allocation7], %s205
          %207 = dma.done %s203, 128
        $region48: #{tpu_custom_call.1} parent=43 // pred_fallthru
          _
      $region44: #{tpu_custom_call.1} parent=5 // pred_fallthru
        _
    $region6: #{tpu_custom_call.1} parent=1 // loop_footer
      %s19 = sadd.s32 1, %s15
    $region7: #{tpu_custom_call.1} parent=1 // loop_footer_branch
      %14 = sbr.rel target = $region3
    $region8: #{tpu_custom_call.1} parent=1 // loop_exit
      _
    %208 = vsyncpa [#allocation3], 1
    %s209 = scalar_lea.sflag [#allocation3], 1
    %210 = vsyncpa %s209, 1
    %211 = vsyncpa [#allocation6], 1
    %212 = vsyncpa [#allocation4], 1
    %s213 = scalar_lea.sflag [#allocation4], 1
    %214 = vsyncpa %s213, 1

// kernel: tpu_custom_call.1
$region0: #{tpu_custom_call.1}
  #allocation0 [shape = 'u32[]', space=smem, size = 0x4, offset = 0x4, fixed_abs, tag = 'smem constant byte address 0x4 - core index']
  #allocation1 [shape = 'u32[144,128]{1,0:T(1,128)}', space=vmem, size = 0x12000, scoped, tag = 'internal scratch']
  %s0 = inlined_call_operand.vmem [shape: bf16[8,192], index: 0, kind: input, shape index: {}]
  %s1 = inlined_call_operand.vmem [shape: bf16[192,32], index: 1, kind: input, shape index: {}]
  %s2 = inlined_call_operand.vmem [shape: f32[1,32], index: 2, kind: input, shape index: {}]
  %s3 = inlined_call_operand.hbm [shape: f32[8,32], index: 3, kind: output, shape index: {}]
  %s4 = sld [smem:[#allocation0]]
  $region22: #{tpu_custom_call.1} parent=0
    _
  %s6 = ssub.s32 1, %s4
  %s7 = scalar_select 0, %s6, %s4
  $region1: #{tpu_custom_call.1} parent=0
    #allocation2 [shape = 'u8[4096]{0}', space=vmem, size = 0x1000, scoped, tag = 'output window, operand 0, single buffered']
    #allocation3 [shape = 's32[1]{0}', space=sflag, size = 0x4, scoped, tag = 'scoped memory for tpu_custom_call.1']
    %8 = vsyncpa [#allocation3], 0
    // Predicated region
    $region2: #{tpu_custom_call.1} parent=1 // pred_check
      _
    $region3: #{tpu_custom_call.1} parent=1 // pred_check_branch
      %10 = sbr.rel (0) target = $region5
    $region4: #{tpu_custom_call.1} parent=1 // pred_region
      _
    $region5: #{tpu_custom_call.1} parent=1 // pred_fallthru
      _
    // Predicated region
    $region6: #{tpu_custom_call.1} parent=1 // pred_check
      _
    $region7: #{tpu_custom_call.1} parent=1 // pred_check_branch
      %12 = sbr.rel (0) target = $region9
    $region8: #{tpu_custom_call.1} parent=1 // pred_region
      _
    $region9: #{tpu_custom_call.1} parent=1 // pred_fallthru
      _
    // Predicated region
    $region10: #{tpu_custom_call.1} parent=1 // pred_check
      _
    $region11: #{tpu_custom_call.1} parent=1 // pred_check_branch
      %14 = sbr.rel (0) target = $region13
    $region12: #{tpu_custom_call.1} parent=1 // pred_region
      _
    $region13: #{tpu_custom_call.1} parent=1 // pred_fallthru
      _
    %v16 = vld [vmem:[%s0] sm:$0xff]
    %v17 = vld [vmem:[%s1] sm:$0xf]
    %v18 = vld [vmem:[%s1 + $0x4] sm:$0xf]
    %v19 = vld [vmem:[%s1 + $0x8] sm:$0xf]
    %v20 = vld [vmem:[%s1 + $0xc] sm:$0xf]
    %v21 = vld [vmem:[%s1 + $0x10] sm:$0xf]
    %v22 = vld [vmem:[%s1 + $0x14] sm:$0xf]
    %v23 = vld [vmem:[%s1 + $0x18] sm:$0xf]
    %v24 = vld [vmem:[%s1 + $0x1c] sm:$0xf]
    %v25 = vld [vmem:[%s1 + $0x20] sm:$0xf]
    %v26 = vld [vmem:[%s1 + $0x24] sm:$0xf]
    %v27 = vld [vmem:[%s1 + $0x28] sm:$0xf]
    %v28 = vld [vmem:[%s1 + $0x2c] sm:$0xf]
    %v29 = vld [vmem:[%s1 + $0x30] sm:$0xf]
    %v30 = vld [vmem:[%s1 + $0x34] sm:$0xf]
    %v31 = vld [vmem:[%s1 + $0x38] sm:$0xf]
    %v32 = vld [vmem:[%s1 + $0x3c] sm:$0xf]
    %v33 = vld [vmem:[%s1 + $0x40] sm:$0xf]
    %v34 = vld [vmem:[%s1 + $0x44] sm:$0xf]
    %v35 = vld [vmem:[%s1 + $0x48] sm:$0xf]
    %v36 = vld [vmem:[%s1 + $0x4c] sm:$0xf]
    %v37 = vld [vmem:[%s1 + $0x50] sm:$0xf]
    %v38 = vld [vmem:[%s1 + $0x54] sm:$0xf]
    %v39 = vld [vmem:[%s1 + $0x58] sm:$0xf]
    %v40 = vld [vmem:[%s1 + $0x5c] sm:$0xf]
    %v41 = vld [vmem:[%s2] sm:$0x1]
    %v43 = vlaneseq
    %v44 = vshrl.u32 %v43, 7
    %v45 = vsub.s32 0, %v44
    %v46 = vrot.slane %v41, %v45
    %v49 = vunpack.c.l.b16 %v16
    %v50 = vunpack.c.h.b16 %v16
    %v51 = vpack.c.b16 %v49, %v49
    %v52 = vpack.c.b16 %v50, %v50
    %v78 = vunpack.c.l.b16 %v17
    %v79 = vunpack.c.l.b16 %v18
    %v80 = vunpack.c.l.b16 %v19
    %v81 = vunpack.c.l.b16 %v20
    %v82 = vunpack.c.l.b16 %v21
    %v83 = vunpack.c.l.b16 %v22
    %v84 = vunpack.c.l.b16 %v23
    %v85 = vunpack.c.l.b16 %v24
    %v86 = vunpack.c.l.b16 %v25
    %v87 = vunpack.c.l.b16 %v26
    %v88 = vunpack.c.l.b16 %v27
    %v89 = vunpack.c.l.b16 %v28
    %v90 = vunpack.c.l.b16 %v29
    %v91 = vunpack.c.l.b16 %v30
    %v92 = vunpack.c.l.b16 %v31
    %v93 = vunpack.c.l.b16 %v32
    %v94 = vunpack.c.l.b16 %v33
    %v95 = vunpack.c.l.b16 %v34
    %v96 = vunpack.c.l.b16 %v35
    %v97 = vunpack.c.l.b16 %v36
    %v98 = vunpack.c.l.b16 %v37
    %v99 = vunpack.c.l.b16 %v38
    %v100 = vunpack.c.l.b16 %v39
    %v101 = vunpack.c.l.b16 %v40
    %v102 = vpack.c.b16 %v79, %v78
    %v103 = vpack.c.b16 %v81, %v80
    %v104 = vpack.c.b16 %v83, %v82
    %v105 = vpack.c.b16 %v85, %v84
    %v106 = vpack.c.b16 %v87, %v86
    %v107 = vpack.c.b16 %v89, %v88
    %v108 = vpack.c.b16 %v91, %v90
    %v109 = vpack.c.b16 %v93, %v92
    %v110 = vpack.c.b16 %v95, %v94
    %v111 = vpack.c.b16 %v97, %v96
    %v112 = vpack.c.b16 %v99, %v98
    %v113 = vpack.c.b16 %v101, %v100
    %vm126 = vcmask 523264
    %v128 = vsel %vm126, %v52, 0
    %130 = vmatprep.subr.bf16.mxu0 0
    %131 = vmatpush1.bf16.msra.mxu0 %v109
    %132 = vmatprep.subr.bf16.mxu0 0
    %133 = vmatpush1.bf16.msra.mxu0 %v108
    %134 = vmatprep.subr.bf16.mxu0 0
    %135 = vmatpush1.bf16.msra.mxu0 %v107
    %136 = vmatprep.subr.bf16.mxu0 0
    %137 = vmatpush1.bf16.msra.mxu0 %v106
    %138 = vmatprep.subr.bf16.mxu0 0
    %139 = vmatpush1.bf16.msra.mxu0 %v105
    %140 = vmatprep.subr.bf16.mxu0 0
    %141 = vmatpush1.bf16.msra.mxu0 %v104
    %142 = vmatprep.subr.bf16.mxu0 0
    %143 = vmatpush1.bf16.msra.mxu0 %v103
    %144 = vmatprep.subr.bf16.mxu0 0
    %145 = vmatpush1.bf16.msra.mxu0 %v102
    %146 = vmatprep.subr.bf16.mxu0 0
    %147 = vmatpush2.bf16.msra.mxu0 0
    %148 = vmatprep.subr.bf16.mxu0 0
    %149 = vmatpush2.bf16.msra.mxu0 0
    %150 = vmatprep.subr.bf16.mxu0 0
    %151 = vmatpush2.bf16.msra.mxu0 0
    %152 = vmatprep.subr.bf16.mxu0 0
    %153 = vmatpush2.bf16.msra.mxu0 0
    %154 = vmatprep.subr.bf16.mxu0 0
    %155 = vmatpush2.bf16.msra.mxu0 %v113
    %156 = vmatprep.subr.bf16.mxu0 0
    %157 = vmatpush2.bf16.msra.mxu0 %v112
    %158 = vmatprep.subr.bf16.mxu0 0
    %159 = vmatpush2.bf16.msra.mxu0 %v111
    %160 = vmatprep.subr.bf16.mxu0 0
    %161 = vmatpush2.bf16.msra.mxu0 %v110
    %162 = vmatprep.mubr.bf16.mxu0 %v128
    %163 = vmatmul.mubr.bf16.gmra.mxu0 %v51
    %v164 = vpop.f32.mrf.mxu0
    %v165 = vadd.f32 %v46, %v164
    %v166 = vpop.f32.mrf.mxu0
    %v167 = vpop.f32.mrf.mxu0
    %v168 = vpop.f32.mrf.mxu0
    %169 = vdwg.mxu0
    %vm170 = vcmask 261120
    %171 = vst.msk [vmem:[#allocation2] sm:$0xff] %vm170, %v165
    // Predicated region
    $region14: #{tpu_custom_call.1} parent=1 // pred_check
      _
    $region15: #{tpu_custom_call.1} parent=1 // pred_check_branch
      %173 = sbr.rel (0) target = $region17
    $region16: #{tpu_custom_call.1} parent=1 // pred_region
      %s175 = ssub.s32 128, 128
      %176 = vsyncadd [#allocation3], %s175
      %s178 = sshll.u32 [#allocation2], 4
      %s179 = int_to_ptr.vmem [resolvable:$true] %s178
      %181 = dma.vmem_to_hbm [thread:$0]  %s179, 128, %s3, [#allocation3]
    $region17: #{tpu_custom_call.1} parent=1 // pred_fallthru
      _
    // Predicated region
    $region18: #{tpu_custom_call.1} parent=1 // pred_check
      _
    $region19: #{tpu_custom_call.1} parent=1 // pred_check_branch
      %183 = sbr.rel (0) target = $region21
    $region20: #{tpu_custom_call.1} parent=1 // pred_region
      %184 = dma.done [#allocation3], 128
    $region21: #{tpu_custom_call.1} parent=1 // pred_fallthru
      _
    %185 = vsyncpa [#allocation3], 1

</llo_original>
